<compile_context>
chip_gen: v7x
topology: tpu7x:2x2x1
jax: 0.10.0
libtpu: 0.0.40
codegen_flags: <defaults>
</compile_context>

<pallas_src>
import functools

import jax
import jax.numpy as jnp
from jax import lax
from jax.experimental import pallas as pl
from jax.experimental.pallas import tpu as pltpu


_VMEM_LIMIT = 48 * 1024 * 1024   # fits v7x (64 MiB physical) as well as v5e/v6e


def _round_up(x, m):
    return (x + m - 1) // m * m


def _detect_multi_tc():
    """Only multi-TensorCore chips (v7x) benefit from forcing a parallel grid
    axis of extent >= 2; on single-TC v5e/v6e the split is pure overhead."""
    try:
        kinds = {d.device_kind.lower() for d in jax.devices()}
    except Exception:
        return False
    return any("v7" in k for k in kinds)


_MULTI_TC = _detect_multi_tc()


def _m_plan(M, cap=512):
    padM = _round_up(M, 16)           # bf16 min sublane tile is 16
    if padM <= cap:
        return padM, padM
    return _round_up(M, cap), cap


def _c_pad(C):
    return _round_up(C, 128)


def _maybe_split_lane(other_tiles, pad, t):
    """Split the lane tile on multi-TC chips so a parallel axis has extent >= 2."""
    if not _MULTI_TC:
        return t
    if other_tiles == 1 and pad // t == 1 and t >= 256 and (t // 2) % 128 == 0:
        return t // 2
    return t


# ----------------------------------------------------------------------------
# Pallas kernels
# ----------------------------------------------------------------------------

def _matmul_bias_act_kernel(x_ref, w_ref, b_ref, o_ref, *, act):
    # Whole-K single step: dot -> +bias -> (relu) -> store, no scratch.
    r = jnp.dot(x_ref[...], w_ref[...], preferred_element_type=jnp.float32)
    r = r + b_ref[...]
    if act:
        r = jnp.maximum(r, 0.0)
    o_ref[...] = r.astype(o_ref.dtype)


def _agg_multi_kernel(*refs, n_in, has_res):
    """Fused HG aggregation: sum_i x_i @ w1_i -> +b1, relu -> @w2 -> +b2, relu
    [-> + residual].  Replaces the channel concat + two 1x1 convs."""
    xs = refs[:n_in]
    ws = refs[n_in:2 * n_in]
    b1_ref = refs[2 * n_in]
    w2_ref = refs[2 * n_in + 1]
    b2_ref = refs[2 * n_in + 2]
    r_ref = refs[2 * n_in + 3] if has_res else None
    o_ref = refs[-1]
    t = jnp.dot(xs[0][...], ws[0][...], preferred_element_type=jnp.float32)
    for i in range(1, n_in):
        t = t + jnp.dot(xs[i][...], ws[i][...], preferred_element_type=jnp.float32)
    t = jnp.maximum(t + b1_ref[...], 0.0).astype(jnp.bfloat16)
    r = jnp.dot(t, w2_ref[...], preferred_element_type=jnp.float32)
    r = jnp.maximum(r + b2_ref[...], 0.0)
    if has_res:
        r = r + r_ref[...].astype(jnp.float32)
    o_ref[...] = r.astype(o_ref.dtype)


def _light_layer_kernel(x_ref, w1_ref, b1_ref, w2_ref, b2_ref, o_ref, t_ref,
                        *, k, pad, H, W):
    """Fused light block layer: 1x1 conv (no act) + kxk stride-1 depthwise (relu).

    Spatial is kept flattened as rows (H*W, C).  The 1x1 result is written into
    a zero-padded flat VMEM scratch; each depthwise tap is a shifted row window
    of that scratch (H-axis borders fall into the zero pad, W-axis borders are
    handled by a cheap per-row column mask)."""
    HW = H * W
    SH = pad * W + pad                      # max |row shift| over all taps
    Cmid = o_ref.shape[-1]
    t_ref[...] = jnp.zeros(t_ref.shape, t_ref.dtype)
    t = jnp.dot(x_ref[...], w1_ref[...], preferred_element_type=jnp.float32)
    t_ref[SH:SH + HW, :] = t + b1_ref[...]
    row = lax.broadcasted_iota(jnp.int32, (HW, 1), 0)
    if (W & (W - 1)) == 0:
        ow = row & (W - 1)
    else:
        ow = row % W
    acc = jnp.zeros((HW, Cmid), jnp.float32)
    tap = 0
    for kh in range(k):
        for kw in range(k):
            dh = kh - pad
            dw = kw - pad
            d = dh * W + dw
            ts = t_ref[SH + d:SH + d + HW, :]
            wt = w2_ref[tap].astype(jnp.float32)
            if dw == 0:
                acc = acc + ts * wt
            else:
                valid = (ow + dw >= 0) & (ow + dw < W)
                acc = acc + jnp.where(valid, ts, 0.0) * wt
            tap += 1
    acc = jnp.maximum(acc + b2_ref[...], 0.0)
    o_ref[...] = acc.astype(o_ref.dtype)


def _dw_taps_kernel(t_ref, w_ref, b_ref, o_ref, *, ntaps, act):
    acc = jnp.zeros(o_ref.shape, jnp.float32)
    for t in range(ntaps):
        acc = acc + t_ref[t].astype(jnp.float32) * w_ref[t].astype(jnp.float32)
    acc = acc + b_ref[...]
    if act:
        acc = jnp.maximum(acc, 0.0)
    o_ref[...] = acc.astype(o_ref.dtype)


def _max_taps_kernel(t_ref, o_ref, *, ntaps):
    r = t_ref[0]
    for t in range(1, ntaps):
        r = jnp.maximum(r, t_ref[t])
    o_ref[...] = r


# ----------------------------------------------------------------------------
# Kernel wrappers
# ----------------------------------------------------------------------------

def _matmul_prepadded(x, wp, bp, n_ret, act):
    """x:(M,K) bf16 @ wp:(padK,padN) bf16 (prepadded) + bp:(1,padN) f32."""
    M, K = x.shape
    padK, padN = wp.shape
    assert padK <= 4096, "whole-K matmul only; add a K grid axis for larger K"
    padM, tm = _m_plan(M)
    tn = _maybe_split_lane(padM // tm, padN, padN)
    xp = jnp.pad(x, ((0, padM - M), (0, padK - K)))
    out = pl.pallas_call(
        functools.partial(_matmul_bias_act_kernel, act=act),
        out_shape=jax.ShapeDtypeStruct((padM, padN), jnp.bfloat16),
        grid_spec=pltpu.PrefetchScalarGridSpec(
            num_scalar_prefetch=0,
            grid=(padM // tm, padN // tn),
            in_specs=[
                pl.BlockSpec((tm, padK), lambda i, j: (i, 0)),
                pl.BlockSpec((padK, tn), lambda i, j: (0, j)),
                pl.BlockSpec((1, tn), lambda i, j: (0, j)),
            ],
            out_specs=pl.BlockSpec((tm, tn), lambda i, j: (i, j)),
        ),
        compiler_params=pltpu.CompilerParams(
            dimension_semantics=("parallel", "parallel"),
            vmem_limit_bytes=_VMEM_LIMIT),
    )(xp, wp, bp)
    return out[:M, :n_ret]


@functools.partial(jax.jit,
                   static_argnames=("k", "cout", "stride", "padding", "act",
                                    "ret_padded"))
def _conv_impl(x, wp, bp, k, cout, stride, padding, act, ret_padded):
    """Dense conv via im2col + Pallas matmul (weights prepadded & BN-folded)."""
    N, H, W, Cin = x.shape
    x = x.astype(jnp.bfloat16)
    if k == 1 and stride == 1 and padding == 0:
        OH, OW = H, W
        pat = x.reshape(N * H * W, Cin)
    else:
        xp = jnp.pad(x, ((0, 0), (padding, padding), (padding, padding), (0, 0)))
        Hp, Wp = H + 2 * padding, W + 2 * padding
        OH = (Hp - k) // stride + 1
        OW = (Wp - k) // stride + 1
        # TODO(synk): fold the KH*KW taps into the kernel to avoid this im2col.
        cols = [xp[:, kh:kh + stride * (OH - 1) + 1:stride,
                   kw:kw + stride * (OW - 1) + 1:stride, :]
                for kh in range(k) for kw in range(k)]
        pat = jnp.concatenate(cols, axis=-1).reshape(N * OH * OW, k * k * Cin)
    n_ret = wp.shape[1] if ret_padded else cout
    out = _matmul_prepadded(pat, wp, bp, n_ret, act)
    return out.reshape(N, OH, OW, n_ret)


@functools.partial(jax.jit, static_argnames=("has_res",))
def _agg_impl(xs, w1s, b1, w2, b2, res, has_res):
    """Fused concat + agg_sq (1x1, relu) + agg_ex (1x1, relu) [+ residual]."""
    n_in = len(xs)
    N, H, W, _ = xs[0].shape
    M = N * H * W
    padM, tm = _m_plan(M, cap=256)
    padMid, padN2 = w2.shape
    tn = _maybe_split_lane(padM // tm, padN2, padN2)
    xms = [jnp.pad(x.astype(jnp.bfloat16).reshape(M, x.shape[-1]),
                   ((0, padM - M), (0, 0))) for x in xs]
    ins = list(xms) + list(w1s) + [b1, w2, b2]
    in_specs = [pl.BlockSpec((tm, xm.shape[1]), lambda i, j: (i, 0))
                for xm in xms]
    in_specs += [pl.BlockSpec(wc.shape, lambda i, j: (0, 0)) for wc in w1s]
    in_specs += [
        pl.BlockSpec((1, padMid), lambda i, j: (0, 0)),
        pl.BlockSpec((padMid, tn), lambda i, j: (0, j)),
        pl.BlockSpec((1, tn), lambda i, j: (0, j)),
    ]
    if has_res:
        rm = jnp.pad(res.astype(jnp.bfloat16).reshape(M, res.shape[-1]),
                     ((0, padM - M), (0, 0)))
        ins.append(rm)
        in_specs.append(pl.BlockSpec((tm, tn), lambda i, j: (i, j)))
    out = pl.pallas_call(
        functools.partial(_agg_multi_kernel, n_in=n_in, has_res=has_res),
        out_shape=jax.ShapeDtypeStruct((padM, padN2), jnp.bfloat16),
        grid_spec=pltpu.PrefetchScalarGridSpec(
            num_scalar_prefetch=0,
            grid=(padM // tm, padN2 // tn),
            in_specs=in_specs,
            out_specs=pl.BlockSpec((tm, tn), lambda i, j: (i, j)),
        ),
        compiler_params=pltpu.CompilerParams(
            dimension_semantics=("parallel", "parallel"),
            vmem_limit_bytes=_VMEM_LIMIT),
    )(*ins)
    return out[:M, :].reshape(N, H, W, padN2)


@functools.partial(jax.jit, static_argnames=("k", "pad"))
def _light_layer_impl(x, w1, b1, w2, b2, k, pad):
    """Fused 1x1 conv (no act) + kxk stride-1 depthwise conv (relu)."""
    N, H, W, Cin = x.shape
    Cmid = w1.shape[1]
    HW = H * W
    SH = pad * W + pad
    xf = x.astype(jnp.bfloat16).reshape(N, HW, Cin)
    out = pl.pallas_call(
        functools.partial(_light_layer_kernel, k=k, pad=pad, H=H, W=W),
        out_shape=jax.ShapeDtypeStruct((N, HW, Cmid), jnp.bfloat16),
        grid_spec=pltpu.PrefetchScalarGridSpec(
            num_scalar_prefetch=0,
            grid=(N,),
            in_specs=[
                pl.BlockSpec((None, HW, Cin), lambda n: (n, 0, 0)),
                pl.BlockSpec((Cin, Cmid), lambda n: (0, 0)),
                pl.BlockSpec((1, Cmid), lambda n: (0, 0)),
                pl.BlockSpec((k * k, 1, Cmid), lambda n: (0, 0, 0)),
                pl.BlockSpec((1, Cmid), lambda n: (0, 0)),
            ],
            out_specs=pl.BlockSpec((None, HW, Cmid), lambda n: (n, 0, 0)),
            scratch_shapes=[pltpu.VMEM((HW + 2 * SH, Cmid), jnp.float32)],
        ),
        compiler_params=pltpu.CompilerParams(
            dimension_semantics=("parallel",),
            vmem_limit_bytes=_VMEM_LIMIT),
    )(xf, w1, b1, w2, b2)
    return out.reshape(N, H, W, Cmid)


@functools.partial(jax.jit, static_argnames=("k", "stride", "padding", "act"))
def _dwconv_taps_impl(x, wp, bp, k, stride, padding, act):
    """Strided depthwise conv (only the 3 downsample layers take this path)."""
    N, H, W, C = x.shape
    padC = wp.shape[-1]
    x = x.astype(jnp.bfloat16)
    xp = jnp.pad(x, ((0, 0), (padding, padding), (padding, padding), (0, 0)))
    Hp, Wp = H + 2 * padding, W + 2 * padding
    OH = (Hp - k) // stride + 1
    OW = (Wp - k) // stride + 1
    # TODO(synk): accumulate the strided taps in-kernel instead of stacking.
    taps = jnp.stack(
        [xp[:, kh:kh + stride * (OH - 1) + 1:stride,
            kw:kw + stride * (OW - 1) + 1:stride, :]
         for kh in range(k) for kw in range(k)], axis=0)
    M = N * OH * OW
    taps = taps.reshape(k * k, M, C)
    padM, tm = _m_plan(M)
    tc = _maybe_split_lane(padM // tm, padC, padC)
    tp = jnp.pad(taps, ((0, 0), (0, padM - M), (0, padC - C)))
    out = pl.pallas_call(
        functools.partial(_dw_taps_kernel, ntaps=k * k, act=act),
        out_shape=jax.ShapeDtypeStruct((padM, padC), jnp.bfloat16),
        grid_spec=pltpu.PrefetchScalarGridSpec(
            num_scalar_prefetch=0,
            grid=(padM // tm, padC // tc),
            in_specs=[
                pl.BlockSpec((k * k, tm, tc), lambda i, j: (0, i, j)),
                pl.BlockSpec((k * k, 1, tc), lambda i, j: (0, 0, j)),
                pl.BlockSpec((1, tc), lambda i, j: (0, j)),
            ],
            out_specs=pl.BlockSpec((tm, tc), lambda i, j: (i, j)),
        ),
        compiler_params=pltpu.CompilerParams(
            dimension_semantics=("parallel", "parallel"),
            vmem_limit_bytes=_VMEM_LIMIT),
    )(tp, wp, bp)
    return out[:M, :C].reshape(N, OH, OW, C)


@jax.jit
def _maxpool2x2_s1_impl(x):
    """MaxPool2d(kernel=2, stride=1, ceil_mode=True) on NHWC (pre-padded) input."""
    N, H, W, C = x.shape
    OH, OW = H - 1, W - 1
    M = N * OH * OW
    # TODO(synk): accumulate the 4 pool taps in-kernel instead of stacking.
    taps = jnp.stack([x[:, kh:kh + OH, kw:kw + OW, :]
                      for kh in range(2) for kw in range(2)], axis=0)
    taps = taps.reshape(4, M, C)
    padC = _c_pad(C)
    padM, tm = _m_plan(M)
    tp = jnp.pad(taps, ((0, 0), (0, padM - M), (0, padC - C)))
    out = pl.pallas_call(
        functools.partial(_max_taps_kernel, ntaps=4),
        out_shape=jax.ShapeDtypeStruct((padM, padC), tp.dtype),
        grid_spec=pltpu.PrefetchScalarGridSpec(
            num_scalar_prefetch=0,
            grid=(padM // tm,),
            in_specs=[pl.BlockSpec((4, tm, padC), lambda i: (0, i, 0))],
            out_specs=pl.BlockSpec((tm, padC), lambda i: (i, 0)),
        ),
        compiler_params=pltpu.CompilerParams(
            dimension_semantics=("parallel",),
            vmem_limit_bytes=_VMEM_LIMIT),
    )(tp)
    return out[:M, :C].reshape(N, OH, OW, C)


# ----------------------------------------------------------------------------
# HGNetV2-B4 configuration (timm `hgnetv2_b4`)
# ----------------------------------------------------------------------------

B4_STEM_CHS = (32, 48)
# in_chs, mid_chs, out_chs, blocks, downsample, light_block, kernel, layer_num
B4_STAGES = (
    (48, 48, 128, 1, False, False, 3, 6),
    (128, 96, 512, 1, True, False, 3, 6),
    (512, 192, 1024, 3, True, True, 5, 6),
    (1024, 384, 2048, 1, True, True, 5, 6),
)
OUT_INDICES = (1, 2, 3)   # feat8 (512ch), feat16 (1024ch), feat32 (2048ch)


class _ParamGen:
    def __init__(self, key):
        self.key = key
        self.count = 0

    def next(self):
        self.count += 1
        return jax.random.fold_in(self.key, self.count)


def _fold_bn(pg, w_shape, fan_in, cout):
    w = jax.random.normal(pg.next(), w_shape, jnp.float32) / jnp.sqrt(float(fan_in))
    gamma = 1.0 + 0.1 * jax.random.normal(pg.next(), (cout,), jnp.float32)
    beta = 0.05 * jax.random.normal(pg.next(), (cout,), jnp.float32)
    mean = 0.05 * jax.random.normal(pg.next(), (cout,), jnp.float32)
    var = 0.9 + 0.2 * jax.random.uniform(pg.next(), (cout,), jnp.float32)
    scale = gamma / jnp.sqrt(var + 1e-5)
    bias = beta - mean * scale
    return w, scale, bias


def _make_conv(pg, cin, cout, k, cin_pad=None):
    """Dense conv + folded BN, pre-padded to lane-aligned (padK, padN) bf16.
    If cin_pad is set, weight rows are laid out for a padded-channel input
    (zeros on the pad lanes), so padded activations are consumed directly."""
    w, scale, bias = _fold_bn(pg, (k, k, cin, cout), k * k * cin, cout)
    w = w * scale[None, None, None, :]
    if cin_pad is not None and cin_pad > cin:
        w = jnp.pad(w, ((0, 0), (0, 0), (0, cin_pad - cin), (0, 0)))
    K = k * k * w.shape[2]
    padK = _round_up(K, 128)
    padN = _round_up(cout, 128)
    wp = jnp.pad(w.reshape(K, cout),
                 ((0, padK - K), (0, padN - cout))).astype(jnp.bfloat16)
    bp = jnp.pad(bias, (0, padN - cout)).reshape(1, padN).astype(jnp.float32)
    return {"w": wp, "b": bp, "k": k, "cout": cout}


def _make_dwconv(pg, c, k):
    """Depthwise conv + folded BN, pre-padded to (k*k, 1, padC) bf16."""
    w, scale, bias = _fold_bn(pg, (k, k, c), k * k, c)
    w = w * scale[None, None, :]
    padC = _c_pad(c)
    wp = jnp.pad(w.reshape(k * k, 1, c),
                 ((0, 0), (0, 0), (0, padC - c))).astype(jnp.bfloat16)
    bp = jnp.pad(bias, (0, padC - c)).reshape(1, padC).astype(jnp.float32)
    return {"w": wp, "b": bp, "k": k, "c": c}


def _make_agg(pg, seg_true, seg_pad, mid, cout):
    """agg_sq (1x1) split per concat segment (row-padded per branch) + agg_ex."""
    K = sum(seg_true)
    w, scale, bias = _fold_bn(pg, (K, mid), K, mid)
    w = w * scale[None, :]
    padMid = _round_up(mid, 128)
    chunks = []
    off = 0
    for c, cp in zip(seg_true, seg_pad):
        wc = jnp.pad(w[off:off + c],
                     ((0, cp - c), (0, padMid - mid))).astype(jnp.bfloat16)
        chunks.append(wc)
        off += c
    b1 = jnp.pad(bias, (0, padMid - mid)).reshape(1, padMid).astype(jnp.float32)
    w2, scale2, bias2 = _fold_bn(pg, (mid, cout), mid, cout)
    w2 = w2 * scale2[None, :]
    padN2 = _round_up(cout, 128)
    w2p = jnp.pad(w2, ((0, padMid - mid), (0, padN2 - cout))).astype(jnp.bfloat16)
    b2 = jnp.pad(bias2, (0, padN2 - cout)).reshape(1, padN2).astype(jnp.float32)
    return {"w1": tuple(chunks), "b1": b1, "w2": w2p, "b2": b2, "cout": cout}


def build_params(key):
    pg = _ParamGen(key)
    mid, out = B4_STEM_CHS
    p = {
        "stem1": _make_conv(pg, 3, mid, 3),
        "stem2a": _make_conv(pg, mid, mid // 2, 2),
        "stem2b": _make_conv(pg, mid // 2, mid, 2),
        "stem3": _make_conv(pg, mid * 2, mid, 3),
        "stem4": _make_conv(pg, mid, out, 1),
    }
    stages = []
    for (cin, cmid, cout, nblk, down, light, k, ln) in B4_STAGES:
        st = {}
        if down:
            st["downsample"] = _make_dwconv(pg, cin, 3)
        blocks = []
        for bi in range(nblk):
            bin_ = cin if bi == 0 else cout
            bin_pad = _c_pad(bin_)
            cmid_pad = _c_pad(cmid)
            layers = []
            for li in range(ln):
                lin = bin_ if li == 0 else cmid
                lin_pad = bin_pad if li == 0 else cmid_pad
                if light:
                    layers.append({
                        "conv1": _make_conv(pg, lin, cmid, 1, cin_pad=lin_pad),
                        "conv2": _make_dwconv(pg, cmid, k),
                    })
                else:
                    layers.append({"conv": _make_conv(pg, lin, cmid, k,
                                                      cin_pad=lin_pad)})
            seg_true = [bin_] + [cmid] * ln
            seg_pad = [bin_pad] + [cmid_pad] * ln
            agg = _make_agg(pg, seg_true, seg_pad, cout // 2, cout)
            blocks.append({"layers": layers, "agg": agg, "residual": bi > 0})
        st["blocks"] = blocks
        stages.append(st)
    p["stages"] = stages
    return p


# ----------------------------------------------------------------------------
# Forward pass
# ----------------------------------------------------------------------------

def conv_forward(x, p, stride, padding, act, ret_padded=False):
    return _conv_impl(x, p["w"], p["b"], k=p["k"], cout=p["cout"],
                      stride=stride, padding=padding, act=act,
                      ret_padded=ret_padded)


def _stem_forward(p, x):
    x = conv_forward(x, p["stem1"], 2, 1, True)
    x = jnp.pad(x, ((0, 0), (0, 1), (0, 1), (0, 0)))           # F.pad(x,(0,1,0,1))
    x2 = conv_forward(x, p["stem2a"], 1, 0, True)
    x2 = jnp.pad(x2, ((0, 0), (0, 1), (0, 1), (0, 0)))
    x2 = conv_forward(x2, p["stem2b"], 1, 0, True)
    x1 = _maxpool2x2_s1_impl(x)
    x = jnp.concatenate([x1, x2], axis=-1)
    x = conv_forward(x, p["stem3"], 2, 1, True)
    # Return padded channels so the stages consume lane-aligned activations.
    x = conv_forward(x, p["stem4"], 1, 0, True, ret_padded=True)
    return x


def _hg_block_forward(blk, x, light, k):
    identity = x
    outs = [x]
    for lyr in blk["layers"]:
        if light:
            x = _light_layer_impl(x, lyr["conv1"]["w"], lyr["conv1"]["b"],
                                  lyr["conv2"]["w"], lyr["conv2"]["b"],
                                  k=k, pad=(k - 1) // 2)
        else:
            x = conv_forward(x, lyr["conv"], 1, (k - 1) // 2, True,
                             ret_padded=True)
        outs.append(x)
    res = identity if blk["residual"] else None
    agg = blk["agg"]
    return _agg_impl(tuple(outs), agg["w1"], agg["b1"], agg["w2"], agg["b2"],
                     res, has_res=blk["residual"])


def _stage_forward(st, cfg, x):
    (_, _, _, _, down, light, k, _) = cfg
    if down:
        d = st["downsample"]
        x = _dwconv_taps_impl(x, d["w"], d["b"], k=3, stride=2, padding=1,
                              act=False)
    for blk in st["blocks"]:
        x = _hg_block_forward(blk, x, light, k)
    return x


def hgnetv2_b4_forward(params, x_nchw):
    """Returns (feat8, feat16, feat32), each NCHW like the PyTorch module."""
    x = jnp.transpose(x_nchw, (0, 2, 3, 1)).astype(jnp.bfloat16)   # NCHW -> NHWC
    x = _stem_forward(params, x)
    feats = []
    for i, (st, cfg) in enumerate(zip(params["stages"], B4_STAGES)):
        x = _stage_forward(st, cfg, x)
        if i in OUT_INDICES:
            feats.append(jnp.transpose(x, (0, 3, 1, 2)).astype(jnp.float32))
    return tuple(feats)


# ----------------------------------------------------------------------------
# Main
# ----------------------------------------------------------------------------

if __name__ == "__main__":
    key = jax.random.PRNGKey(0)
    pkey, xkey = jax.random.split(key)
    params = build_params(pkey)
    # Small input consistent with the module: NCHW, 3 channels, 64x64 spatial.
    x = jax.random.normal(xkey, (2, 3, 64, 64), jnp.float32)

    feat8, feat16, feat32 = hgnetv2_b4_forward(params, x)
    jax.block_until_ready((feat8, feat16, feat32))

    assert feat8.shape == (2, 512, 8, 8), feat8.shape
    assert feat16.shape == (2, 1024, 4, 4), feat16.shape
    assert feat32.shape == (2, 2048, 2, 2), feat32.shape
    assert jnp.all(jnp.isfinite(feat8)) and jnp.all(jnp.isfinite(feat32))
    print("KERNEL_OK")
</pallas_src>

<mosaic_0001>
module attributes {stable_mosaic.version = 11 : i64} {
  func.func @_matmul_bias_act_kernel(%arg0: i32, %arg1: i32, %arg2: memref<512x128xbf16, #tpu.memory_space<vmem>>, %arg3: memref<128x128xbf16, #tpu.memory_space<vmem>>, %arg4: memref<1x128xf32, #tpu.memory_space<vmem>>, %arg5: memref<512x128xbf16, #tpu.memory_space<vmem>>) attributes {dimension_semantics = [#tpu.dimension_semantics<parallel>, #tpu.dimension_semantics<parallel>], iteration_bounds = array<i64: 4, 1>, scalar_prefetch = 0 : i64, scratch_operands = 0 : i64, tpu.core_type = #tpu.core_type<tc>, window_params = [{transform_indices = @transform_0, window_bounds = array<i64: 512, 128>}, {transform_indices = @transform_1, window_bounds = array<i64: 128, 128>}, {transform_indices = @transform_2, window_bounds = array<i64: 1, 128>}, {transform_indices = @transform_3, window_bounds = array<i64: 512, 128>}]} {
    %c0 = arith.constant 0 : index
    %c0_0 = arith.constant 0 : index
    %0 = vector.load %arg2[%c0, %c0_0] : memref<512x128xbf16, #tpu.memory_space<vmem>>, vector<512x128xbf16>
    %c0_1 = arith.constant 0 : index
    %c0_2 = arith.constant 0 : index
    %1 = vector.load %arg3[%c0_1, %c0_2] : memref<128x128xbf16, #tpu.memory_space<vmem>>, vector<128x128xbf16>
    %cst = arith.constant dense<0.000000e+00> : vector<512x128xf32>
    %2 = tpu.matmul %0, %1, %cst {dimension_numbers = #tpu.dot_dimension_numbers<[1], [0], [0], [1], [0, 0, 1, 1], [], []>} : vector<512x128xbf16>, vector<128x128xbf16>, vector<512x128xf32> -> vector<512x128xf32>
    %c0_3 = arith.constant 0 : index
    %c0_4 = arith.constant 0 : index
    %3 = vector.load %arg4[%c0_3, %c0_4] : memref<1x128xf32, #tpu.memory_space<vmem>>, vector<1x128xf32>
    %4 = vector.broadcast %3 : vector<1x128xf32> to vector<512x128xf32>
    %5 = arith.addf %2, %4 : vector<512x128xf32>
    %cst_5 = arith.constant 0.000000e+00 : f32
    %6 = vector.broadcast %cst_5 : f32 to vector<512x128xf32>
    %7 = arith.maximumf %5, %6 : vector<512x128xf32>
    %8 = arith.truncf %7 : vector<512x128xf32> to vector<512x128xbf16>
    %c0_6 = arith.constant 0 : index
    %c0_7 = arith.constant 0 : index
    %9 = vector.load %arg5[%c0_6, %c0_7] : memref<512x128xbf16, #tpu.memory_space<vmem>>, vector<512x128xbf16>
    tpu.vector_store %arg5[%c0_6, %c0_7], %8 {strides = array<i32>} : memref<512x128xbf16, #tpu.memory_space<vmem>>, vector<512x128xbf16>,
    return
  }
  func.func @transform_0(%arg0: i32, %arg1: i32) -> (i32, i32) {
    %c0_i32 = arith.constant 0 : i32
    %c0_i32_0 = arith.constant 0 : i32
    return %arg0, %c0_i32 : i32, i32
  }
  func.func @transform_1(%arg0: i32, %arg1: i32) -> (i32, i32) {
    %c0_i32 = arith.constant 0 : i32
    %c0_i32_0 = arith.constant 0 : i32
    return %c0_i32, %arg1 : i32, i32
  }
  func.func @transform_2(%arg0: i32, %arg1: i32) -> (i32, i32) {
    %c0_i32 = arith.constant 0 : i32
    %c0_i32_0 = arith.constant 0 : i32
    return %c0_i32, %arg1 : i32, i32
  }
  func.func @transform_3(%arg0: i32, %arg1: i32) -> (i32, i32) {
    %c0_i32 = arith.constant 0 : i32
    return %arg0, %arg1 : i32, i32
  }
}

</mosaic_0001>

<llo_original>
// kernel: _conv_impl.1
$region0: #{_conv_impl.1}
  #allocation0 [shape = 'u32[]', space=smem, size = 0x4, offset = 0x4, fixed_abs, tag = 'smem constant byte address 0x4 - core index']
  #allocation1 [shape = 'u32[144,128]{1,0:T(1,128)}', space=vmem, size = 0x12000, scoped, tag = 'internal scratch']
  %s0 = inlined_call_operand.vmem [shape: bf16[2048,128], index: 0, kind: input, shape index: {}]
  %s1 = inlined_call_operand.vmem [shape: bf16[128,128], index: 1, kind: input, shape index: {}]
  %s2 = inlined_call_operand.vmem [shape: f32[1,128], index: 2, kind: input, shape index: {}]
  %s3 = inlined_call_operand.hbm [shape: bf16[2048,128], index: 3, kind: output, shape index: {}]
  %s4 = sld [smem:[#allocation0]]
  $region45: #{_conv_impl.1} parent=0
    _
  %s6 = ssub.s32 1, %s4
  %s7 = scalar_select 0, %s6, %s4
  $region1: #{_conv_impl.1} parent=0
    #allocation2 [shape = 'u8[262144]{0}', space=vmem, size = 0x40000, scoped, tag = 'output window, operand 0']
    #allocation3 [shape = 's32[2]{0}', space=sflag, size = 0x8, scoped, tag = 'scoped memory for _conv_impl.1']
    %8 = vsyncpa [#allocation3], 0
    %s9 = scalar_lea.sflag [#allocation3], 1
    %10 = vsyncpa %s9, 0
    loop: start=0, step=1, limit=6
    $region2: #{_conv_impl.1} parent=1 // loop_pre_header
      _
    $region3: #{_conv_impl.1} parent=1 // loop_header
      %s12 = sphi 0, %s16
      %p13 = scmp.ge.s32.totalorder %s12, 6
      %s19 = sphi 0, %s31
      %s20 = sphi 0, %s27
      %s21 = sphi 0, %s19
      %s22 = sphi 0, %s20
      %s23 = sphi 0, %s21
      %s24 = sphi 0, %s22
      %s34 = sphi 0, %s36
      %s37 = sphi 0, %s34
      %s38 = sphi 0, %s37
      %s54 = sphi 0, %s38
      %s60 = sphi 0, %s62
      %s63 = sphi 0, %s60
      %s64 = sphi 0, %s63
      %s80 = sphi 0, %s64
      %s86 = sphi 0, %s88
      %s89 = sphi 0, %s86
      %s90 = sphi 0, %s89
      %s106 = sphi 0, %s90
      %s114 = sphi 0, %s116
      %s117 = sphi 0, %s114
      %s118 = sphi 0, %s117
      %s134 = sphi 0, %s118
    $region4: #{_conv_impl.1} parent=1 // loop_header_branch
      %15 = sbr.rel (%p13) target = $region8
    $region5: #{_conv_impl.1} parent=1 // loop_body
      %s17 = ssub.s32 %s12, 1
      %s18 = ssub.s32 %s12, 2
      %s25 = sadd.s32 1, %s20
      %p26 = scmp.ge.s32.totalorder %s25, 1
      %s27 = scalar_select %p26, 0, %s25
      %s28 = sadd.s32 1, %s19
      %s29 = scalar_select %p26, %s28, %s19
      %p30 = scmp.ge.s32.totalorder %s29, 4
      %s31 = scalar_select %p30, 0, %s29
      %s32 = ssub.s32 %s19, %s31
      %p33 = scmp.eq.s32.totalorder %s32, 0
      %s35 = sadd.s32 %s34, 1
      %s36 = scalar_select %p33, %s34, %s35
      %p39 = pneg %p33
      %p40 = scmp.eq.s32.totalorder %s12, 3
      %p41 = por %p39, %p40
      %p42 = scmp.ne.s32.totalorder %s34, %s37
      %p43 = scmp.eq.s32.totalorder %s12, 0
      %p44 = por %p42, %p43
      %p45 = scmp.ne.s32.totalorder %s34, %s37
      %p46 = scmp.eq.s32.totalorder %s17, 3
      %p47 = por %p45, %p46
      %p48 = scmp.ne.s32.totalorder %s37, %s38
      %p49 = scmp.eq.s32.totalorder %s17, 0
      %p50 = por %p48, %p49
      %p51 = scmp.ne.s32.totalorder %s37, %s38
      %p52 = scmp.eq.s32.totalorder %s18, 3
      %p53 = por %p51, %p52
      %p55 = scmp.ne.s32.totalorder %s38, %s54
      %p56 = scmp.eq.s32.totalorder %s18, 0
      %p57 = por %p55, %p56
      %s58 = ssub.s32 %s20, %s27
      %p59 = scmp.eq.s32.totalorder %s58, 0
      %s61 = sadd.s32 %s60, 1
      %s62 = scalar_select %p59, %s60, %s61
      %p65 = pneg %p59
      %p66 = scmp.eq.s32.totalorder %s12, 3
      %p67 = por %p65, %p66
      %p68 = scmp.ne.s32.totalorder %s60, %s63
      %p69 = scmp.eq.s32.totalorder %s12, 0
      %p70 = por %p68, %p69
      %p71 = scmp.ne.s32.totalorder %s60, %s63
      %p72 = scmp.eq.s32.totalorder %s17, 3
      %p73 = por %p71, %p72
      %p74 = scmp.ne.s32.totalorder %s63, %s64
      %p75 = scmp.eq.s32.totalorder %s17, 0
      %p76 = por %p74, %p75
      %p77 = scmp.ne.s32.totalorder %s63, %s64
      %p78 = scmp.eq.s32.totalorder %s18, 3
      %p79 = por %p77, %p78
      %p81 = scmp.ne.s32.totalorder %s64, %s80
      %p82 = scmp.eq.s32.totalorder %s18, 0
      %p83 = por %p81, %p82
      %s84 = ssub.s32 %s20, %s27
      %p85 = scmp.eq.s32.totalorder %s84, 0
      %s87 = sadd.s32 %s86, 1
      %s88 = scalar_select %p85, %s86, %s87
      %p91 = pneg %p85
      %p92 = scmp.eq.s32.totalorder %s12, 3
      %p93 = por %p91, %p92
      %p94 = scmp.ne.s32.totalorder %s86, %s89
      %p95 = scmp.eq.s32.totalorder %s12, 0
      %p96 = por %p94, %p95
      %p97 = scmp.ne.s32.totalorder %s86, %s89
      %p98 = scmp.eq.s32.totalorder %s17, 3
      %p99 = por %p97, %p98
      %p100 = scmp.ne.s32.totalorder %s89, %s90
      %p101 = scmp.eq.s32.totalorder %s17, 0
      %p102 = por %p100, %p101
      %p103 = scmp.ne.s32.totalorder %s89, %s90
      %p104 = scmp.eq.s32.totalorder %s18, 3
      %p105 = por %p103, %p104
      %p107 = scmp.ne.s32.totalorder %s90, %s106
      %p108 = scmp.eq.s32.totalorder %s18, 0
      %p109 = por %p107, %p108
      %s110 = ssub.s32 %s19, %s31
      %s111 = ssub.s32 %s20, %s27
      %s112 = sor.u32 %s110, %s111
      %p113 = scmp.eq.s32.totalorder %s112, 0
      %s115 = sadd.s32 %s114, 1
      %s116 = scalar_select %p113, %s114, %s115
      %p119 = pneg %p113
      %p120 = scmp.eq.s32.totalorder %s12, 3
      %p121 = por %p119, %p120
      %p122 = scmp.ne.s32.totalorder %s114, %s117
      %p123 = scmp.eq.s32.totalorder %s12, 0
      %p124 = por %p122, %p123
      %p125 = scmp.ne.s32.totalorder %s114, %s117
      %p126 = scmp.eq.s32.totalorder %s17, 3
      %p127 = por %p125, %p126
      %p128 = scmp.ne.s32.totalorder %s117, %s118
      %p129 = scmp.eq.s32.totalorder %s17, 0
      %p130 = por %p128, %p129
      %p131 = scmp.ne.s32.totalorder %s117, %s118
      %p132 = scmp.eq.s32.totalorder %s18, 3
      %p133 = por %p131, %p132
      %p135 = scmp.ne.s32.totalorder %s118, %s134
      %p136 = scmp.eq.s32.totalorder %s18, 0
      %p137 = por %p135, %p136
      %p138 = scmp.le.s32.totalorder 1, %s12
      %p139 = scmp.lt.s32.totalorder %s12, 5
      %p140 = pnand %p138, %p139
      %p141 = pneg %p140
      // Predicated region
      $region9: #{_conv_impl.1} parent=5 // pred_check
        _
      $region10: #{_conv_impl.1} parent=5 // pred_check_branch
        %143 = sbr.rel (%p140) target = $region12
      $region11: #{_conv_impl.1} parent=5 // pred_region
        %s144 = ssub.s32 %s12, 1
        // Predicated region
        $region13: #{_conv_impl.1} parent=11 // pred_check
          %p145 = pneg %p76
        $region14: #{_conv_impl.1} parent=11 // pred_check_branch
          %147 = sbr.rel (%p145) target = $region16
        $region15: #{_conv_impl.1} parent=11 // pred_region
          %p148 = scmp.lt.s32.totalorder %s22, 0
          %s149 = scalar_select %p148, %s22, 0
          %s150 = smul.addr %s149, 4
          %s151 = scalar_lea.vmem %s1, %s150
        $region16: #{_conv_impl.1} parent=11 // pred_fallthru
          _
        // Predicated region
        $region17: #{_conv_impl.1} parent=11 // pred_check
          %p152 = pneg %p102
        $region18: #{_conv_impl.1} parent=11 // pred_check_branch
          %154 = sbr.rel (%p152) target = $region20
        $region19: #{_conv_impl.1} parent=11 // pred_region
          %p155 = scmp.lt.s32.totalorder %s22, 0
          %s156 = scalar_select %p155, %s22, 0
          %s157 = scalar_lea.vmem %s2, %s156
        $region20: #{_conv_impl.1} parent=11 // pred_fallthru
          _
      $region12: #{_conv_impl.1} parent=5 // pred_fallthru
        _
      %p158 = scmp.lt.s32.totalorder %s12, 4
      // Predicated region
      $region21: #{_conv_impl.1} parent=5 // pred_check
        %p159 = pneg %p158
      $region22: #{_conv_impl.1} parent=5 // pred_check_branch
        %161 = sbr.rel (%p159) target = $region24
      $region23: #{_conv_impl.1} parent=5 // pred_region
        // Predicated region
        $region25: #{_conv_impl.1} parent=23 // pred_check
          %p162 = pneg %p44
        $region26: #{_conv_impl.1} parent=23 // pred_check_branch
          %164 = sbr.rel (%p162) target = $region28
        $region27: #{_conv_impl.1} parent=23 // pred_region
          %s165 = smul.u32 64, %s19
          %p166 = scmp.lt.s32.totalorder %s165, 255
          %s167 = scalar_select %p166, %s165, 255
          %s168 = smul.addr %s167, 4
          %s169 = scalar_lea.vmem %s0, %s168
          %s170 = smul.u32 64, %s19
        $region28: #{_conv_impl.1} parent=23 // pred_fallthru
          _
      $region24: #{_conv_impl.1} parent=5 // pred_fallthru
        _
      %p171 = scmp.le.s32.totalorder 1, %s12
      %p172 = scmp.lt.s32.totalorder %s12, 5
      %p173 = pnand %p171, %p172
      %p174 = pneg %p173
      // Predicated region
      $region29: #{_conv_impl.1} parent=5 // pred_check
        _
      $region30: #{_conv_impl.1} parent=5 // pred_check_branch
        %176 = sbr.rel (%p173) target = $region32
      $region31: #{_conv_impl.1} parent=5 // pred_region
        %s177 = ssub.s32 %s12, 1
        %s178 = smul.u32 64, %s21
        %p179 = scmp.lt.s32.totalorder %s178, 255
        %s180 = scalar_select %p179, %s178, 255
        %s181 = smul.addr %s180, 4
        %s182 = scalar_lea.vmem %s0, %s181
        %p183 = pneg %p50
        %p184 = pneg %p47
        %p185 = scmp.lt.s32.totalorder %s22, 0
        %s186 = scalar_select %p185, %s22, 0
        %s187 = smul.addr %s186, 4
        %s188 = scalar_lea.vmem %s1, %s187
        %p189 = pneg %p76
        %p190 = pneg %p73
        %p191 = scmp.lt.s32.totalorder %s22, 0
        %s192 = scalar_select %p191, %s22, 0
        %s193 = scalar_lea.vmem %s2, %s192
        %p194 = pneg %p102
        %p195 = pneg %p99
        %p196 = pneg %p130
        %p197 = pneg %p127
        %s198 = sand.u32 %s117, 1
        %s199 = scalar_lea.sflag [#allocation3], %s198
        %s200 = sand.u32 %s117, 1
        %s201 = smul.addr %s200, 256
        %s202 = scalar_lea.vmem [#allocation2], %s201
        %s203 = smul.u32 64, %s21
        %p204 = scmp.lt.s32.totalorder %s203, 255
        %s205 = scalar_select %p204, %s203, 255
        %s206 = smul.addr %s205, 4
        %s207 = scalar_lea.vmem %s0, %s206
        %s208 = smul.u32 64, %s21
        %p209 = scmp.lt.s32.totalorder %s22, 0
        %s210 = scalar_select %p209, %s22, 0
        %s211 = smul.addr %s210, 4
        %s212 = scalar_lea.vmem %s1, %s211
        %p213 = scmp.lt.s32.totalorder %s22, 0
        %s214 = scalar_select %p213, %s22, 0
        %s215 = scalar_lea.vmem %s2, %s214
        %s216 = smul.u32 64, %s21
        %v218 = vld [vmem:[%s207] sm:$0xf]
        %v219 = vld [vmem:[%s207 + $0x4] sm:$0xf]
        %v220 = vld [vmem:[%s207 + $0x8] sm:$0xf]
        %v221 = vld [vmem:[%s207 + $0xc] sm:$0xf]
        %v222 = vld [vmem:[%s207 + $0x10] sm:$0xf]
        %v223 = vld [vmem:[%s207 + $0x14] sm:$0xf]
        %v224 = vld [vmem:[%s207 + $0x18] sm:$0xf]
        %v225 = vld [vmem:[%s207 + $0x1c] sm:$0xf]
        %v226 = vld [vmem:[%s207 + $0x20] sm:$0xf]
        %v227 = vld [vmem:[%s207 + $0x24] sm:$0xf]
        %v228 = vld [vmem:[%s207 + $0x28] sm:$0xf]
        %v229 = vld [vmem:[%s207 + $0x2c] sm:$0xf]
        %v230 = vld [vmem:[%s207 + $0x30] sm:$0xf]
        %v231 = vld [vmem:[%s207 + $0x34] sm:$0xf]
        %v232 = vld [vmem:[%s207 + $0x38] sm:$0xf]
        %v233 = vld [vmem:[%s207 + $0x3c] sm:$0xf]
        %v234 = vld [vmem:[%s207 + $0x40] sm:$0xf]
        %v235 = vld [vmem:[%s207 + $0x44] sm:$0xf]
        %v236 = vld [vmem:[%s207 + $0x48] sm:$0xf]
        %v237 = vld [vmem:[%s207 + $0x4c] sm:$0xf]
        %v238 = vld [vmem:[%s207 + $0x50] sm:$0xf]
        %v239 = vld [vmem:[%s207 + $0x54] sm:$0xf]
        %v240 = vld [vmem:[%s207 + $0x58] sm:$0xf]
        %v241 = vld [vmem:[%s207 + $0x5c] sm:$0xf]
        %v242 = vld [vmem:[%s207 + $0x60] sm:$0xf]
        %v243 = vld [vmem:[%s207 + $0x64] sm:$0xf]
        %v244 = vld [vmem:[%s207 + $0x68] sm:$0xf]
        %v245 = vld [vmem:[%s207 + $0x6c] sm:$0xf]
        %v246 = vld [vmem:[%s207 + $0x70] sm:$0xf]
        %v247 = vld [vmem:[%s207 + $0x74] sm:$0xf]
        %v248 = vld [vmem:[%s207 + $0x78] sm:$0xf]
        %v249 = vld [vmem:[%s207 + $0x7c] sm:$0xf]
        %v250 = vld [vmem:[%s207 + $0x80] sm:$0xf]
        %v251 = vld [vmem:[%s207 + $0x84] sm:$0xf]
        %v252 = vld [vmem:[%s207 + $0x88] sm:$0xf]
        %v253 = vld [vmem:[%s207 + $0x8c] sm:$0xf]
        %v254 = vld [vmem:[%s207 + $0x90] sm:$0xf]
        %v255 = vld [vmem:[%s207 + $0x94] sm:$0xf]
        %v256 = vld [vmem:[%s207 + $0x98] sm:$0xf]
        %v257 = vld [vmem:[%s207 + $0x9c] sm:$0xf]
        %v258 = vld [vmem:[%s207 + $0xa0] sm:$0xf]
        %v259 = vld [vmem:[%s207 + $0xa4] sm:$0xf]
        %v260 = vld [vmem:[%s207 + $0xa8] sm:$0xf]
        %v261 = vld [vmem:[%s207 + $0xac] sm:$0xf]
        %v262 = vld [vmem:[%s207 + $0xb0] sm:$0xf]
        %v263 = vld [vmem:[%s207 + $0xb4] sm:$0xf]
        %v264 = vld [vmem:[%s207 + $0xb8] sm:$0xf]
        %v265 = vld [vmem:[%s207 + $0xbc] sm:$0xf]
        %v266 = vld [vmem:[%s207 + $0xc0] sm:$0xf]
        %v267 = vld [vmem:[%s207 + $0xc4] sm:$0xf]
        %v268 = vld [vmem:[%s207 + $0xc8] sm:$0xf]
        %v269 = vld [vmem:[%s207 + $0xcc] sm:$0xf]
        %v270 = vld [vmem:[%s207 + $0xd0] sm:$0xf]
        %v271 = vld [vmem:[%s207 + $0xd4] sm:$0xf]
        %v272 = vld [vmem:[%s207 + $0xd8] sm:$0xf]
        %v273 = vld [vmem:[%s207 + $0xdc] sm:$0xf]
        %v274 = vld [vmem:[%s207 + $0xe0] sm:$0xf]
        %v275 = vld [vmem:[%s207 + $0xe4] sm:$0xf]
        %v276 = vld [vmem:[%s207 + $0xe8] sm:$0xf]
        %v277 = vld [vmem:[%s207 + $0xec] sm:$0xf]
        %v278 = vld [vmem:[%s207 + $0xf0] sm:$0xf]
        %v279 = vld [vmem:[%s207 + $0xf4] sm:$0xf]
        %v280 = vld [vmem:[%s207 + $0xf8] sm:$0xf]
        %v281 = vld [vmem:[%s207 + $0xfc] sm:$0xf]
        %v282 = vld [vmem:[%s212] sm:$0xf]
        %v283 = vld [vmem:[%s212 + $0x4] sm:$0xf]
        %v284 = vld [vmem:[%s212 + $0x8] sm:$0xf]
        %v285 = vld [vmem:[%s212 + $0xc] sm:$0xf]
        %v286 = vld [vmem:[%s212 + $0x10] sm:$0xf]
        %v287 = vld [vmem:[%s212 + $0x14] sm:$0xf]
        %v288 = vld [vmem:[%s212 + $0x18] sm:$0xf]
        %v289 = vld [vmem:[%s212 + $0x1c] sm:$0xf]
        %v290 = vld [vmem:[%s212 + $0x20] sm:$0xf]
        %v291 = vld [vmem:[%s212 + $0x24] sm:$0xf]
        %v292 = vld [vmem:[%s212 + $0x28] sm:$0xf]
        %v293 = vld [vmem:[%s212 + $0x2c] sm:$0xf]
        %v294 = vld [vmem:[%s212 + $0x30] sm:$0xf]
        %v295 = vld [vmem:[%s212 + $0x34] sm:$0xf]
        %v296 = vld [vmem:[%s212 + $0x38] sm:$0xf]
        %v297 = vld [vmem:[%s212 + $0x3c] sm:$0xf]
        %v298 = vld [vmem:[%s215] sm:$0x1]
        %v300 = vlaneseq
        %v301 = vshrl.u32 %v300, 7
        %v302 = vsub.s32 0, %v301
        %v303 = vrot.slane %v298, %v302
        %v369 = vunpack.c.l.b16 %v218
        %v370 = vunpack.c.l.b16 %v219
        %v371 = vunpack.c.l.b16 %v220
        %v372 = vunpack.c.l.b16 %v221
        %v373 = vunpack.c.l.b16 %v222
        %v374 = vunpack.c.l.b16 %v223
        %v375 = vunpack.c.l.b16 %v224
        %v376 = vunpack.c.l.b16 %v225
        %v377 = vunpack.c.l.b16 %v226
        %v378 = vunpack.c.l.b16 %v227
        %v379 = vunpack.c.l.b16 %v228
        %v380 = vunpack.c.l.b16 %v229
        %v381 = vunpack.c.l.b16 %v230
        %v382 = vunpack.c.l.b16 %v231
        %v383 = vunpack.c.l.b16 %v232
        %v384 = vunpack.c.l.b16 %v233
        %v385 = vunpack.c.l.b16 %v234
        %v386 = vunpack.c.l.b16 %v235
        %v387 = vunpack.c.l.b16 %v236
        %v388 = vunpack.c.l.b16 %v237
        %v389 = vunpack.c.l.b16 %v238
        %v390 = vunpack.c.l.b16 %v239
        %v391 = vunpack.c.l.b16 %v240
        %v392 = vunpack.c.l.b16 %v241
        %v393 = vunpack.c.l.b16 %v242
        %v394 = vunpack.c.l.b16 %v243
        %v395 = vunpack.c.l.b16 %v244
        %v396 = vunpack.c.l.b16 %v245
        %v397 = vunpack.c.l.b16 %v246
        %v398 = vunpack.c.l.b16 %v247
        %v399 = vunpack.c.l.b16 %v248
        %v400 = vunpack.c.l.b16 %v249
        %v401 = vunpack.c.l.b16 %v250
        %v402 = vunpack.c.l.b16 %v251
        %v403 = vunpack.c.l.b16 %v252
        %v404 = vunpack.c.l.b16 %v253
        %v405 = vunpack.c.l.b16 %v254
        %v406 = vunpack.c.l.b16 %v255
        %v407 = vunpack.c.l.b16 %v256
        %v408 = vunpack.c.l.b16 %v257
        %v409 = vunpack.c.l.b16 %v258
        %v410 = vunpack.c.l.b16 %v259
        %v411 = vunpack.c.l.b16 %v260
        %v412 = vunpack.c.l.b16 %v261
        %v413 = vunpack.c.l.b16 %v262
        %v414 = vunpack.c.l.b16 %v263
        %v415 = vunpack.c.l.b16 %v264
        %v416 = vunpack.c.l.b16 %v265
        %v417 = vunpack.c.l.b16 %v266
        %v418 = vunpack.c.l.b16 %v267
        %v419 = vunpack.c.l.b16 %v268
        %v420 = vunpack.c.l.b16 %v269
        %v421 = vunpack.c.l.b16 %v270
        %v422 = vunpack.c.l.b16 %v271
        %v423 = vunpack.c.l.b16 %v272
        %v424 = vunpack.c.l.b16 %v273
        %v425 = vunpack.c.l.b16 %v274
        %v426 = vunpack.c.l.b16 %v275
        %v427 = vunpack.c.l.b16 %v276
        %v428 = vunpack.c.l.b16 %v277
        %v429 = vunpack.c.l.b16 %v278
        %v430 = vunpack.c.l.b16 %v279
        %v431 = vunpack.c.l.b16 %v280
        %v432 = vunpack.c.l.b16 %v281
        %v433 = vpack.c.b16 %v370, %v369
        %v434 = vpack.c.b16 %v372, %v371
        %v435 = vpack.c.b16 %v374, %v373
        %v436 = vpack.c.b16 %v376, %v375
        %v437 = vpack.c.b16 %v378, %v377
        %v438 = vpack.c.b16 %v380, %v379
        %v439 = vpack.c.b16 %v382, %v381
        %v440 = vpack.c.b16 %v384, %v383
        %v441 = vpack.c.b16 %v386, %v385
        %v442 = vpack.c.b16 %v388, %v387
        %v443 = vpack.c.b16 %v390, %v389
        %v444 = vpack.c.b16 %v392, %v391
        %v445 = vpack.c.b16 %v394, %v393
        %v446 = vpack.c.b16 %v396, %v395
        %v447 = vpack.c.b16 %v398, %v397
        %v448 = vpack.c.b16 %v400, %v399
        %v449 = vpack.c.b16 %v402, %v401
        %v450 = vpack.c.b16 %v404, %v403
        %v451 = vpack.c.b16 %v406, %v405
        %v452 = vpack.c.b16 %v408, %v407
        %v453 = vpack.c.b16 %v410, %v409
        %v454 = vpack.c.b16 %v412, %v411
        %v455 = vpack.c.b16 %v414, %v413
        %v456 = vpack.c.b16 %v416, %v415
        %v457 = vpack.c.b16 %v418, %v417
        %v458 = vpack.c.b16 %v420, %v419
        %v459 = vpack.c.b16 %v422, %v421
        %v460 = vpack.c.b16 %v424, %v423
        %v461 = vpack.c.b16 %v426, %v425
        %v462 = vpack.c.b16 %v428, %v427
        %v463 = vpack.c.b16 %v430, %v429
        %v464 = vpack.c.b16 %v432, %v431
        %v513 = vunpack.c.l.b16 %v282
        %v514 = vunpack.c.l.b16 %v283
        %v515 = vunpack.c.l.b16 %v284
        %v516 = vunpack.c.l.b16 %v285
        %v517 = vunpack.c.l.b16 %v286
        %v518 = vunpack.c.l.b16 %v287
        %v519 = vunpack.c.l.b16 %v288
        %v520 = vunpack.c.l.b16 %v289
        %v521 = vunpack.c.l.b16 %v290
        %v522 = vunpack.c.l.b16 %v291
        %v523 = vunpack.c.l.b16 %v292
        %v524 = vunpack.c.l.b16 %v293
        %v525 = vunpack.c.l.b16 %v294
        %v526 = vunpack.c.l.b16 %v295
        %v527 = vunpack.c.l.b16 %v296
        %v528 = vunpack.c.l.b16 %v297
        %v529 = vpack.c.b16 %v514, %v513
        %v530 = vpack.c.b16 %v516, %v515
        %v531 = vpack.c.b16 %v518, %v517
        %v532 = vpack.c.b16 %v520, %v519
        %v533 = vpack.c.b16 %v522, %v521
        %v534 = vpack.c.b16 %v524, %v523
        %v535 = vpack.c.b16 %v526, %v525
        %v536 = vpack.c.b16 %v528, %v527
        %545 = vmatprep.subr.bf16.mxu0 0
        %546 = vmatpush1.bf16.msra.mxu0 %v529
        %547 = vmatprep.subr.bf16.mxu0 0
        %548 = vmatpush1.bf16.msra.mxu0 %v530
        %549 = vmatprep.subr.bf16.mxu0 0
        %550 = vmatpush1.bf16.msra.mxu0 %v531
        %551 = vmatprep.subr.bf16.mxu0 0
        %552 = vmatpush1.bf16.msra.mxu0 %v532
        %553 = vmatprep.subr.bf16.mxu0 0
        %554 = vmatpush1.bf16.msra.mxu0 %v533
        %555 = vmatprep.subr.bf16.mxu0 0
        %556 = vmatpush1.bf16.msra.mxu0 %v534
        %557 = vmatprep.subr.bf16.mxu0 0
        %558 = vmatpush1.bf16.msra.mxu0 %v535
        %559 = vmatprep.subr.bf16.mxu0 0
        %560 = vmatpush1.bf16.msra.mxu0 %v536
        %561 = vmatprep.subr.bf16.mxu0 0
        %562 = vmatpush1.bf16.msra.mxu0 0
        %563 = vmatprep.subr.bf16.mxu0 0
        %564 = vmatpush1.bf16.msra.mxu0 0
        %565 = vmatprep.subr.bf16.mxu0 0
        %566 = vmatpush1.bf16.msra.mxu0 0
        %567 = vmatprep.subr.bf16.mxu0 0
        %568 = vmatpush1.bf16.msra.mxu0 0
        %569 = vmatprep.subr.bf16.mxu0 0
        %570 = vmatpush1.bf16.msra.mxu0 0
        %571 = vmatprep.subr.bf16.mxu0 0
        %572 = vmatpush1.bf16.msra.mxu0 0
        %573 = vmatprep.subr.bf16.mxu0 0
        %574 = vmatpush1.bf16.msra.mxu0 0
        %575 = vmatprep.subr.bf16.mxu0 0
        %576 = vmatpush1.bf16.msra.mxu0 0
        %577 = vmatprep.mubr.bf16.mxu0 0
        %578 = vmatmul.mubr.bf16.gmra.mrb[0].mxu0 %v433
        %v579 = vpop.f32.mrb[0].mxu0
        %v580 = vadd.f32 %v303, %v579
        %v581 = vpop.f32.mrb[0].mxu0
        %v582 = vpop.f32.mrb[0].mxu0
        %v583 = vadd.f32 %v303, %v582
        %v584 = vpop.f32.mrb[0].mxu0
        %585 = vmatprep.mubr.bf16.mxu0 0
        %586 = vmatmul.mubr.bf16.gmra.mrb[0].mxu0 %v434
        %v587 = vpop.f32.mrb[0].mxu0
        %v588 = vadd.f32 %v303, %v587
        %v589 = vpop.f32.mrb[0].mxu0
        %v590 = vpop.f32.mrb[0].mxu0
        %v591 = vadd.f32 %v303, %v590
        %v592 = vpop.f32.mrb[0].mxu0
        %593 = vmatprep.mubr.bf16.mxu0 0
        %594 = vmatmul.mubr.bf16.gmra.mrb[0].mxu0 %v435
        %v595 = vpop.f32.mrb[0].mxu0
        %v596 = vadd.f32 %v303, %v595
        %v597 = vpop.f32.mrb[0].mxu0
        %v598 = vpop.f32.mrb[0].mxu0
        %v599 = vadd.f32 %v303, %v598
        %v600 = vpop.f32.mrb[0].mxu0
        %601 = vmatprep.mubr.bf16.mxu0 0
        %602 = vmatmul.mubr.bf16.gmra.mrb[0].mxu0 %v436
        %v603 = vpop.f32.mrb[0].mxu0
        %v604 = vadd.f32 %v303, %v603
        %v605 = vpop.f32.mrb[0].mxu0
        %v606 = vpop.f32.mrb[0].mxu0
        %v607 = vadd.f32 %v303, %v606
        %v608 = vpop.f32.mrb[0].mxu0
        %609 = vmatprep.mubr.bf16.mxu0 0
        %610 = vmatmul.mubr.bf16.gmra.mrb[0].mxu0 %v437
        %v611 = vpop.f32.mrb[0].mxu0
        %v612 = vadd.f32 %v303, %v611
        %v613 = vpop.f32.mrb[0].mxu0
        %v614 = vpop.f32.mrb[0].mxu0
        %v615 = vadd.f32 %v303, %v614
        %v616 = vpop.f32.mrb[0].mxu0
        %617 = vmatprep.mubr.bf16.mxu0 0
        %618 = vmatmul.mubr.bf16.gmra.mrb[0].mxu0 %v438
        %v619 = vpop.f32.mrb[0].mxu0
        %v620 = vadd.f32 %v303, %v619
        %v621 = vpop.f32.mrb[0].mxu0
        %v622 = vpop.f32.mrb[0].mxu0
        %v623 = vadd.f32 %v303, %v622
        %v624 = vpop.f32.mrb[0].mxu0
        %625 = vmatprep.mubr.bf16.mxu0 0
        %626 = vmatmul.mubr.bf16.gmra.mrb[0].mxu0 %v439
        %v627 = vpop.f32.mrb[0].mxu0
        %v628 = vadd.f32 %v303, %v627
        %v629 = vpop.f32.mrb[0].mxu0
        %v630 = vpop.f32.mrb[0].mxu0
        %v631 = vadd.f32 %v303, %v630
        %v632 = vpop.f32.mrb[0].mxu0
        %633 = vmatprep.mubr.bf16.mxu0 0
        %634 = vmatmul.mubr.bf16.gmra.mrb[0].mxu0 %v440
        %v635 = vpop.f32.mrb[0].mxu0
        %v636 = vadd.f32 %v303, %v635
        %v637 = vpop.f32.mrb[0].mxu0
        %v638 = vpop.f32.mrb[0].mxu0
        %v639 = vadd.f32 %v303, %v638
        %v640 = vpop.f32.mrb[0].mxu0
        %641 = vmatprep.mubr.bf16.mxu0 0
        %642 = vmatmul.mubr.bf16.gmra.mrb[0].mxu0 %v441
        %v643 = vpop.f32.mrb[0].mxu0
        %v644 = vadd.f32 %v303, %v643
        %v645 = vpop.f32.mrb[0].mxu0
        %v646 = vpop.f32.mrb[0].mxu0
        %v647 = vadd.f32 %v303, %v646
        %v648 = vpop.f32.mrb[0].mxu0
        %649 = vmatprep.mubr.bf16.mxu0 0
        %650 = vmatmul.mubr.bf16.gmra.mrb[0].mxu0 %v442
        %v651 = vpop.f32.mrb[0].mxu0
        %v652 = vadd.f32 %v303, %v651
        %v653 = vpop.f32.mrb[0].mxu0
        %v654 = vpop.f32.mrb[0].mxu0
        %v655 = vadd.f32 %v303, %v654
        %v656 = vpop.f32.mrb[0].mxu0
        %657 = vmatprep.mubr.bf16.mxu0 0
        %658 = vmatmul.mubr.bf16.gmra.mrb[0].mxu0 %v443
        %v659 = vpop.f32.mrb[0].mxu0
        %v660 = vadd.f32 %v303, %v659
        %v661 = vpop.f32.mrb[0].mxu0
        %v662 = vpop.f32.mrb[0].mxu0
        %v663 = vadd.f32 %v303, %v662
        %v664 = vpop.f32.mrb[0].mxu0
        %665 = vmatprep.mubr.bf16.mxu0 0
        %666 = vmatmul.mubr.bf16.gmra.mrb[0].mxu0 %v444
        %v667 = vpop.f32.mrb[0].mxu0
        %v668 = vadd.f32 %v303, %v667
        %v669 = vpop.f32.mrb[0].mxu0
        %v670 = vpop.f32.mrb[0].mxu0
        %v671 = vadd.f32 %v303, %v670
        %v672 = vpop.f32.mrb[0].mxu0
        %673 = vmatprep.mubr.bf16.mxu0 0
        %674 = vmatmul.mubr.bf16.gmra.mrb[0].mxu0 %v445
        %v675 = vpop.f32.mrb[0].mxu0
        %v676 = vadd.f32 %v303, %v675
        %v677 = vpop.f32.mrb[0].mxu0
        %v678 = vpop.f32.mrb[0].mxu0
        %v679 = vadd.f32 %v303, %v678
        %v680 = vpop.f32.mrb[0].mxu0
        %681 = vmatprep.mubr.bf16.mxu0 0
        %682 = vmatmul.mubr.bf16.gmra.mrb[0].mxu0 %v446
        %v683 = vpop.f32.mrb[0].mxu0
        %v684 = vadd.f32 %v303, %v683
        %v685 = vpop.f32.mrb[0].mxu0
        %v686 = vpop.f32.mrb[0].mxu0
        %v687 = vadd.f32 %v303, %v686
        %v688 = vpop.f32.mrb[0].mxu0
        %689 = vmatprep.mubr.bf16.mxu0 0
        %690 = vmatmul.mubr.bf16.gmra.mrb[0].mxu0 %v447
        %v691 = vpop.f32.mrb[0].mxu0
        %v692 = vadd.f32 %v303, %v691
        %v693 = vpop.f32.mrb[0].mxu0
        %v694 = vpop.f32.mrb[0].mxu0
        %v695 = vadd.f32 %v303, %v694
        %v696 = vpop.f32.mrb[0].mxu0
        %697 = vmatprep.mubr.bf16.mxu0 0
        %698 = vmatmul.mubr.bf16.gmra.mrb[0].mxu0 %v448
        %v699 = vpop.f32.mrb[0].mxu0
        %v700 = vadd.f32 %v303, %v699
        %v701 = vpop.f32.mrb[0].mxu0
        %v702 = vpop.f32.mrb[0].mxu0
        %v703 = vadd.f32 %v303, %v702
        %v704 = vpop.f32.mrb[0].mxu0
        %705 = vmatprep.mubr.bf16.mxu0 0
        %706 = vmatmul.mubr.bf16.gmra.mrb[0].mxu0 %v449
        %v707 = vpop.f32.mrb[0].mxu0
        %v708 = vadd.f32 %v303, %v707
        %v709 = vpop.f32.mrb[0].mxu0
        %v710 = vpop.f32.mrb[0].mxu0
        %v711 = vadd.f32 %v303, %v710
        %v712 = vpop.f32.mrb[0].mxu0
        %713 = vmatprep.mubr.bf16.mxu0 0
        %714 = vmatmul.mubr.bf16.gmra.mrb[0].mxu0 %v450
        %v715 = vpop.f32.mrb[0].mxu0
        %v716 = vadd.f32 %v303, %v715
        %v717 = vpop.f32.mrb[0].mxu0
        %v718 = vpop.f32.mrb[0].mxu0
        %v719 = vadd.f32 %v303, %v718
        %v720 = vpop.f32.mrb[0].mxu0
        %721 = vmatprep.mubr.bf16.mxu0 0
        %722 = vmatmul.mubr.bf16.gmra.mrb[0].mxu0 %v451
        %v723 = vpop.f32.mrb[0].mxu0
        %v724 = vadd.f32 %v303, %v723
        %v725 = vpop.f32.mrb[0].mxu0
        %v726 = vpop.f32.mrb[0].mxu0
        %v727 = vadd.f32 %v303, %v726
        %v728 = vpop.f32.mrb[0].mxu0
        %729 = vmatprep.mubr.bf16.mxu0 0
        %730 = vmatmul.mubr.bf16.gmra.mrb[0].mxu0 %v452
        %v731 = vpop.f32.mrb[0].mxu0
        %v732 = vadd.f32 %v303, %v731
        %v733 = vpop.f32.mrb[0].mxu0
        %v734 = vpop.f32.mrb[0].mxu0
        %v735 = vadd.f32 %v303, %v734
        %v736 = vpop.f32.mrb[0].mxu0
        %737 = vmatprep.mubr.bf16.mxu0 0
        %738 = vmatmul.mubr.bf16.gmra.mrb[0].mxu0 %v453
        %v739 = vpop.f32.mrb[0].mxu0
        %v740 = vadd.f32 %v303, %v739
        %v741 = vpop.f32.mrb[0].mxu0
        %v742 = vpop.f32.mrb[0].mxu0
        %v743 = vadd.f32 %v303, %v742
        %v744 = vpop.f32.mrb[0].mxu0
        %745 = vmatprep.mubr.bf16.mxu0 0
        %746 = vmatmul.mubr.bf16.gmra.mrb[0].mxu0 %v454
        %v747 = vpop.f32.mrb[0].mxu0
        %v748 = vadd.f32 %v303, %v747
        %v749 = vpop.f32.mrb[0].mxu0
        %v750 = vpop.f32.mrb[0].mxu0
        %v751 = vadd.f32 %v303, %v750
        %v752 = vpop.f32.mrb[0].mxu0
        %753 = vmatprep.mubr.bf16.mxu0 0
        %754 = vmatmul.mubr.bf16.gmra.mrb[0].mxu0 %v455
        %v755 = vpop.f32.mrb[0].mxu0
        %v756 = vadd.f32 %v303, %v755
        %v757 = vpop.f32.mrb[0].mxu0
        %v758 = vpop.f32.mrb[0].mxu0
        %v759 = vadd.f32 %v303, %v758
        %v760 = vpop.f32.mrb[0].mxu0
        %761 = vmatprep.mubr.bf16.mxu0 0
        %762 = vmatmul.mubr.bf16.gmra.mrb[0].mxu0 %v456
        %v763 = vpop.f32.mrb[0].mxu0
        %v764 = vadd.f32 %v303, %v763
        %v765 = vpop.f32.mrb[0].mxu0
        %v766 = vpop.f32.mrb[0].mxu0
        %v767 = vadd.f32 %v303, %v766
        %v768 = vpop.f32.mrb[0].mxu0
        %769 = vmatprep.mubr.bf16.mxu0 0
        %770 = vmatmul.mubr.bf16.gmra.mrb[0].mxu0 %v457
        %v771 = vpop.f32.mrb[0].mxu0
        %v772 = vadd.f32 %v303, %v771
        %v773 = vpop.f32.mrb[0].mxu0
        %v774 = vpop.f32.mrb[0].mxu0
        %v775 = vadd.f32 %v303, %v774
        %v776 = vpop.f32.mrb[0].mxu0
        %777 = vmatprep.mubr.bf16.mxu0 0
        %778 = vmatmul.mubr.bf16.gmra.mrb[0].mxu0 %v458
        %v779 = vpop.f32.mrb[0].mxu0
        %v780 = vadd.f32 %v303, %v779
        %v781 = vpop.f32.mrb[0].mxu0
        %v782 = vpop.f32.mrb[0].mxu0
        %v783 = vadd.f32 %v303, %v782
        %v784 = vpop.f32.mrb[0].mxu0
        %785 = vmatprep.mubr.bf16.mxu0 0
        %786 = vmatmul.mubr.bf16.gmra.mrb[0].mxu0 %v459
        %v787 = vpop.f32.mrb[0].mxu0
        %v788 = vadd.f32 %v303, %v787
        %v789 = vpop.f32.mrb[0].mxu0
        %v790 = vpop.f32.mrb[0].mxu0
        %v791 = vadd.f32 %v303, %v790
        %v792 = vpop.f32.mrb[0].mxu0
        %793 = vmatprep.mubr.bf16.mxu0 0
        %794 = vmatmul.mubr.bf16.gmra.mrb[0].mxu0 %v460
        %v795 = vpop.f32.mrb[0].mxu0
        %v796 = vadd.f32 %v303, %v795
        %v797 = vpop.f32.mrb[0].mxu0
        %v798 = vpop.f32.mrb[0].mxu0
        %v799 = vadd.f32 %v303, %v798
        %v800 = vpop.f32.mrb[0].mxu0
        %801 = vmatprep.mubr.bf16.mxu0 0
        %802 = vmatmul.mubr.bf16.gmra.mrb[0].mxu0 %v461
        %v803 = vpop.f32.mrb[0].mxu0
        %v804 = vadd.f32 %v303, %v803
        %v805 = vpop.f32.mrb[0].mxu0
        %v806 = vpop.f32.mrb[0].mxu0
        %v807 = vadd.f32 %v303, %v806
        %v808 = vpop.f32.mrb[0].mxu0
        %809 = vmatprep.mubr.bf16.mxu0 0
        %810 = vmatmul.mubr.bf16.gmra.mrb[0].mxu0 %v462
        %v811 = vpop.f32.mrb[0].mxu0
        %v812 = vadd.f32 %v303, %v811
        %v813 = vpop.f32.mrb[0].mxu0
        %v814 = vpop.f32.mrb[0].mxu0
        %v815 = vadd.f32 %v303, %v814
        %v816 = vpop.f32.mrb[0].mxu0
        %817 = vmatprep.mubr.bf16.mxu0 0
        %818 = vmatmul.mubr.bf16.gmra.mrb[0].mxu0 %v463
        %v819 = vpop.f32.mrb[0].mxu0
        %v820 = vadd.f32 %v303, %v819
        %v821 = vpop.f32.mrb[0].mxu0
        %v822 = vpop.f32.mrb[0].mxu0
        %v823 = vadd.f32 %v303, %v822
        %v824 = vpop.f32.mrb[0].mxu0
        %825 = vmatprep.mubr.bf16.mxu0 0
        %826 = vmatmul.mubr.bf16.gmra.mrb[0].mxu0 %v464
        %v827 = vpop.f32.mrb[0].mxu0
        %v828 = vadd.f32 %v303, %v827
        %v829 = vpop.f32.mrb[0].mxu0
        %v830 = vpop.f32.mrb[0].mxu0
        %v831 = vadd.f32 %v303, %v830
        %v832 = vpop.f32.mrb[0].mxu0
        %833 = vdwg.mxu0
        %v834 = vmax.f32 %v580, 0.0
        %v835 = vmax.f32 %v583, 0.0
        %v836 = vmax.f32 %v588, 0.0
        %v837 = vmax.f32 %v591, 0.0
        %v838 = vmax.f32 %v596, 0.0
        %v839 = vmax.f32 %v599, 0.0
        %v840 = vmax.f32 %v604, 0.0
        %v841 = vmax.f32 %v607, 0.0
        %v842 = vmax.f32 %v612, 0.0
        %v843 = vmax.f32 %v615, 0.0
        %v844 = vmax.f32 %v620, 0.0
        %v845 = vmax.f32 %v623, 0.0
        %v846 = vmax.f32 %v628, 0.0
        %v847 = vmax.f32 %v631, 0.0
        %v848 = vmax.f32 %v636, 0.0
        %v849 = vmax.f32 %v639, 0.0
        %v850 = vmax.f32 %v644, 0.0
        %v851 = vmax.f32 %v647, 0.0
        %v852 = vmax.f32 %v652, 0.0
        %v853 = vmax.f32 %v655, 0.0
        %v854 = vmax.f32 %v660, 0.0
        %v855 = vmax.f32 %v663, 0.0
        %v856 = vmax.f32 %v668, 0.0
        %v857 = vmax.f32 %v671, 0.0
        %v858 = vmax.f32 %v676, 0.0
        %v859 = vmax.f32 %v679, 0.0
        %v860 = vmax.f32 %v684, 0.0
        %v861 = vmax.f32 %v687, 0.0
        %v862 = vmax.f32 %v692, 0.0
        %v863 = vmax.f32 %v695, 0.0
        %v864 = vmax.f32 %v700, 0.0
        %v865 = vmax.f32 %v703, 0.0
        %v866 = vmax.f32 %v708, 0.0
        %v867 = vmax.f32 %v711, 0.0
        %v868 = vmax.f32 %v716, 0.0
        %v869 = vmax.f32 %v719, 0.0
        %v870 = vmax.f32 %v724, 0.0
        %v871 = vmax.f32 %v727, 0.0
        %v872 = vmax.f32 %v732, 0.0
        %v873 = vmax.f32 %v735, 0.0
        %v874 = vmax.f32 %v740, 0.0
        %v875 = vmax.f32 %v743, 0.0
        %v876 = vmax.f32 %v748, 0.0
        %v877 = vmax.f32 %v751, 0.0
        %v878 = vmax.f32 %v756, 0.0
        %v879 = vmax.f32 %v759, 0.0
        %v880 = vmax.f32 %v764, 0.0
        %v881 = vmax.f32 %v767, 0.0
        %v882 = vmax.f32 %v772, 0.0
        %v883 = vmax.f32 %v775, 0.0
        %v884 = vmax.f32 %v780, 0.0
        %v885 = vmax.f32 %v783, 0.0
        %v886 = vmax.f32 %v788, 0.0
        %v887 = vmax.f32 %v791, 0.0
        %v888 = vmax.f32 %v796, 0.0
        %v889 = vmax.f32 %v799, 0.0
        %v890 = vmax.f32 %v804, 0.0
        %v891 = vmax.f32 %v807, 0.0
        %v892 = vmax.f32 %v812, 0.0
        %v893 = vmax.f32 %v815, 0.0
        %v894 = vmax.f32 %v820, 0.0
        %v895 = vmax.f32 %v823, 0.0
        %v896 = vmax.f32 %v828, 0.0
        %v897 = vmax.f32 %v831, 0.0
        %v898 = vpack.c.bf16 %v835, %v834
        %v899 = vpack.c.bf16 %v837, %v836
        %v900 = vpack.c.bf16 %v839, %v838
        %v901 = vpack.c.bf16 %v841, %v840
        %v902 = vpack.c.bf16 %v843, %v842
        %v903 = vpack.c.bf16 %v845, %v844
        %v904 = vpack.c.bf16 %v847, %v846
        %v905 = vpack.c.bf16 %v849, %v848
        %v906 = vpack.c.bf16 %v851, %v850
        %v907 = vpack.c.bf16 %v853, %v852
        %v908 = vpack.c.bf16 %v855, %v854
        %v909 = vpack.c.bf16 %v857, %v856
        %v910 = vpack.c.bf16 %v859, %v858
        %v911 = vpack.c.bf16 %v861, %v860
        %v912 = vpack.c.bf16 %v863, %v862
        %v913 = vpack.c.bf16 %v865, %v864
        %v914 = vpack.c.bf16 %v867, %v866
        %v915 = vpack.c.bf16 %v869, %v868
        %v916 = vpack.c.bf16 %v871, %v870
        %v917 = vpack.c.bf16 %v873, %v872
        %v918 = vpack.c.bf16 %v875, %v874
        %v919 = vpack.c.bf16 %v877, %v876
        %v920 = vpack.c.bf16 %v879, %v878
        %v921 = vpack.c.bf16 %v881, %v880
        %v922 = vpack.c.bf16 %v883, %v882
        %v923 = vpack.c.bf16 %v885, %v884
        %v924 = vpack.c.bf16 %v887, %v886
        %v925 = vpack.c.bf16 %v889, %v888
        %v926 = vpack.c.bf16 %v891, %v890
        %v927 = vpack.c.bf16 %v893, %v892
        %v928 = vpack.c.bf16 %v895, %v894
        %v929 = vpack.c.bf16 %v897, %v896
        %v962 = vunpack.c.l.b16 %v898
        %v963 = vunpack.c.h.b16 %v898
        %v964 = vunpack.c.l.b16 %v899
        %v965 = vunpack.c.h.b16 %v899
        %v966 = vunpack.c.l.b16 %v900
        %v967 = vunpack.c.h.b16 %v900
        %v968 = vunpack.c.l.b16 %v901
        %v969 = vunpack.c.h.b16 %v901
        %v970 = vunpack.c.l.b16 %v902
        %v971 = vunpack.c.h.b16 %v902
        %v972 = vunpack.c.l.b16 %v903
        %v973 = vunpack.c.h.b16 %v903
        %v974 = vunpack.c.l.b16 %v904
        %v975 = vunpack.c.h.b16 %v904
        %v976 = vunpack.c.l.b16 %v905
        %v977 = vunpack.c.h.b16 %v905
        %v978 = vunpack.c.l.b16 %v906
        %v979 = vunpack.c.h.b16 %v906
        %v980 = vunpack.c.l.b16 %v907
        %v981 = vunpack.c.h.b16 %v907
        %v982 = vunpack.c.l.b16 %v908
        %v983 = vunpack.c.h.b16 %v908
        %v984 = vunpack.c.l.b16 %v909
        %v985 = vunpack.c.h.b16 %v909
        %v986 = vunpack.c.l.b16 %v910
        %v987 = vunpack.c.h.b16 %v910
        %v988 = vunpack.c.l.b16 %v911
        %v989 = vunpack.c.h.b16 %v911
        %v990 = vunpack.c.l.b16 %v912
        %v991 = vunpack.c.h.b16 %v912
        %v992 = vunpack.c.l.b16 %v913
        %v993 = vunpack.c.h.b16 %v913
        %v994 = vunpack.c.l.b16 %v914
        %v995 = vunpack.c.h.b16 %v914
        %v996 = vunpack.c.l.b16 %v915
        %v997 = vunpack.c.h.b16 %v915
        %v998 = vunpack.c.l.b16 %v916
        %v999 = vunpack.c.h.b16 %v916
        %v1000 = vunpack.c.l.b16 %v917
        %v1001 = vunpack.c.h.b16 %v917
        %v1002 = vunpack.c.l.b16 %v918
        %v1003 = vunpack.c.h.b16 %v918
        %v1004 = vunpack.c.l.b16 %v919
        %v1005 = vunpack.c.h.b16 %v919
        %v1006 = vunpack.c.l.b16 %v920
        %v1007 = vunpack.c.h.b16 %v920
        %v1008 = vunpack.c.l.b16 %v921
        %v1009 = vunpack.c.h.b16 %v921
        %v1010 = vunpack.c.l.b16 %v922
        %v1011 = vunpack.c.h.b16 %v922
        %v1012 = vunpack.c.l.b16 %v923
        %v1013 = vunpack.c.h.b16 %v923
        %v1014 = vunpack.c.l.b16 %v924
        %v1015 = vunpack.c.h.b16 %v924
        %v1016 = vunpack.c.l.b16 %v925
        %v1017 = vunpack.c.h.b16 %v925
        %v1018 = vunpack.c.l.b16 %v926
        %v1019 = vunpack.c.h.b16 %v926
        %v1020 = vunpack.c.l.b16 %v927
        %v1021 = vunpack.c.h.b16 %v927
        %v1022 = vunpack.c.l.b16 %v928
        %v1023 = vunpack.c.h.b16 %v928
        %v1024 = vunpack.c.l.b16 %v929
        %v1025 = vunpack.c.h.b16 %v929
        %v1026 = vpack.c.b16 %v962, %v962
        %v1027 = vpack.c.b16 %v963, %v963
        %v1028 = vpack.c.b16 %v964, %v964
        %v1029 = vpack.c.b16 %v965, %v965
        %v1030 = vpack.c.b16 %v966, %v966
        %v1031 = vpack.c.b16 %v967, %v967
        %v1032 = vpack.c.b16 %v968, %v968
        %v1033 = vpack.c.b16 %v969, %v969
        %v1034 = vpack.c.b16 %v970, %v970
        %v1035 = vpack.c.b16 %v971, %v971
        %v1036 = vpack.c.b16 %v972, %v972
        %v1037 = vpack.c.b16 %v973, %v973
        %v1038 = vpack.c.b16 %v974, %v974
        %v1039 = vpack.c.b16 %v975, %v975
        %v1040 = vpack.c.b16 %v976, %v976
        %v1041 = vpack.c.b16 %v977, %v977
        %v1042 = vpack.c.b16 %v978, %v978
        %v1043 = vpack.c.b16 %v979, %v979
        %v1044 = vpack.c.b16 %v980, %v980
        %v1045 = vpack.c.b16 %v981, %v981
        %v1046 = vpack.c.b16 %v982, %v982
        %v1047 = vpack.c.b16 %v983, %v983
        %v1048 = vpack.c.b16 %v984, %v984
        %v1049 = vpack.c.b16 %v985, %v985
        %v1050 = vpack.c.b16 %v986, %v986
        %v1051 = vpack.c.b16 %v987, %v987
        %v1052 = vpack.c.b16 %v988, %v988
        %v1053 = vpack.c.b16 %v989, %v989
        %v1054 = vpack.c.b16 %v990, %v990
        %v1055 = vpack.c.b16 %v991, %v991
        %v1056 = vpack.c.b16 %v992, %v992
        %v1057 = vpack.c.b16 %v993, %v993
        %v1058 = vpack.c.b16 %v994, %v994
        %v1059 = vpack.c.b16 %v995, %v995
        %v1060 = vpack.c.b16 %v996, %v996
        %v1061 = vpack.c.b16 %v997, %v997
        %v1062 = vpack.c.b16 %v998, %v998
        %v1063 = vpack.c.b16 %v999, %v999
        %v1064 = vpack.c.b16 %v1000, %v1000
        %v1065 = vpack.c.b16 %v1001, %v1001
        %v1066 = vpack.c.b16 %v1002, %v1002
        %v1067 = vpack.c.b16 %v1003, %v1003
        %v1068 = vpack.c.b16 %v1004, %v1004
        %v1069 = vpack.c.b16 %v1005, %v1005
        %v1070 = vpack.c.b16 %v1006, %v1006
        %v1071 = vpack.c.b16 %v1007, %v1007
        %v1072 = vpack.c.b16 %v1008, %v1008
        %v1073 = vpack.c.b16 %v1009, %v1009
        %v1074 = vpack.c.b16 %v1010, %v1010
        %v1075 = vpack.c.b16 %v1011, %v1011
        %v1076 = vpack.c.b16 %v1012, %v1012
        %v1077 = vpack.c.b16 %v1013, %v1013
        %v1078 = vpack.c.b16 %v1014, %v1014
        %v1079 = vpack.c.b16 %v1015, %v1015
        %v1080 = vpack.c.b16 %v1016, %v1016
        %v1081 = vpack.c.b16 %v1017, %v1017
        %v1082 = vpack.c.b16 %v1018, %v1018
        %v1083 = vpack.c.b16 %v1019, %v1019
        %v1084 = vpack.c.b16 %v1020, %v1020
        %v1085 = vpack.c.b16 %v1021, %v1021
        %v1086 = vpack.c.b16 %v1022, %v1022
        %v1087 = vpack.c.b16 %v1023, %v1023
        %v1088 = vpack.c.b16 %v1024, %v1024
        %v1089 = vpack.c.b16 %v1025, %v1025
        %1154 = vst [vmem:[%s202] sm:$0xf] %v1026
        %1155 = vst [vmem:[%s202 + $0x4] sm:$0xf] %v1027
        %1156 = vst [vmem:[%s202 + $0x8] sm:$0xf] %v1028
        %1157 = vst [vmem:[%s202 + $0xc] sm:$0xf] %v1029
        %1158 = vst [vmem:[%s202 + $0x10] sm:$0xf] %v1030
        %1159 = vst [vmem:[%s202 + $0x14] sm:$0xf] %v1031
        %1160 = vst [vmem:[%s202 + $0x18] sm:$0xf] %v1032
        %1161 = vst [vmem:[%s202 + $0x1c] sm:$0xf] %v1033
        %1162 = vst [vmem:[%s202 + $0x20] sm:$0xf] %v1034
        %1163 = vst [vmem:[%s202 + $0x24] sm:$0xf] %v1035
        %1164 = vst [vmem:[%s202 + $0x28] sm:$0xf] %v1036
        %1165 = vst [vmem:[%s202 + $0x2c] sm:$0xf] %v1037
        %1166 = vst [vmem:[%s202 + $0x30] sm:$0xf] %v1038
        %1167 = vst [vmem:[%s202 + $0x34] sm:$0xf] %v1039
        %1168 = vst [vmem:[%s202 + $0x38] sm:$0xf] %v1040
        %1169 = vst [vmem:[%s202 + $0x3c] sm:$0xf] %v1041
        %1170 = vst [vmem:[%s202 + $0x40] sm:$0xf] %v1042
        %1171 = vst [vmem:[%s202 + $0x44] sm:$0xf] %v1043
        %1172 = vst [vmem:[%s202 + $0x48] sm:$0xf] %v1044
        %1173 = vst [vmem:[%s202 + $0x4c] sm:$0xf] %v1045
        %1174 = vst [vmem:[%s202 + $0x50] sm:$0xf] %v1046
        %1175 = vst [vmem:[%s202 + $0x54] sm:$0xf] %v1047
        %1176 = vst [vmem:[%s202 + $0x58] sm:$0xf] %v1048
        %1177 = vst [vmem:[%s202 + $0x5c] sm:$0xf] %v1049
        %1178 = vst [vmem:[%s202 + $0x60] sm:$0xf] %v1050
        %1179 = vst [vmem:[%s202 + $0x64] sm:$0xf] %v1051
        %1180 = vst [vmem:[%s202 + $0x68] sm:$0xf] %v1052
        %1181 = vst [vmem:[%s202 + $0x6c] sm:$0xf] %v1053
        %1182 = vst [vmem:[%s202 + $0x70] sm:$0xf] %v1054
        %1183 = vst [vmem:[%s202 + $0x74] sm:$0xf] %v1055
        %1184 = vst [vmem:[%s202 + $0x78] sm:$0xf] %v1056
        %1185 = vst [vmem:[%s202 + $0x7c] sm:$0xf] %v1057
        %1186 = vst [vmem:[%s202 + $0x80] sm:$0xf] %v1058
        %1187 = vst [vmem:[%s202 + $0x84] sm:$0xf] %v1059
        %1188 = vst [vmem:[%s202 + $0x88] sm:$0xf] %v1060
        %1189 = vst [vmem:[%s202 + $0x8c] sm:$0xf] %v1061
        %1190 = vst [vmem:[%s202 + $0x90] sm:$0xf] %v1062
        %1191 = vst [vmem:[%s202 + $0x94] sm:$0xf] %v1063
        %1192 = vst [vmem:[%s202 + $0x98] sm:$0xf] %v1064
        %1193 = vst [vmem:[%s202 + $0x9c] sm:$0xf] %v1065
        %1194 = vst [vmem:[%s202 + $0xa0] sm:$0xf] %v1066
        %1195 = vst [vmem:[%s202 + $0xa4] sm:$0xf] %v1067
        %1196 = vst [vmem:[%s202 + $0xa8] sm:$0xf] %v1068
        %1197 = vst [vmem:[%s202 + $0xac] sm:$0xf] %v1069
        %1198 = vst [vmem:[%s202 + $0xb0] sm:$0xf] %v1070
        %1199 = vst [vmem:[%s202 + $0xb4] sm:$0xf] %v1071
        %1200 = vst [vmem:[%s202 + $0xb8] sm:$0xf] %v1072
        %1201 = vst [vmem:[%s202 + $0xbc] sm:$0xf] %v1073
        %1202 = vst [vmem:[%s202 + $0xc0] sm:$0xf] %v1074
        %1203 = vst [vmem:[%s202 + $0xc4] sm:$0xf] %v1075
        %1204 = vst [vmem:[%s202 + $0xc8] sm:$0xf] %v1076
        %1205 = vst [vmem:[%s202 + $0xcc] sm:$0xf] %v1077
        %1206 = vst [vmem:[%s202 + $0xd0] sm:$0xf] %v1078
        %1207 = vst [vmem:[%s202 + $0xd4] sm:$0xf] %v1079
        %1208 = vst [vmem:[%s202 + $0xd8] sm:$0xf] %v1080
        %1209 = vst [vmem:[%s202 + $0xdc] sm:$0xf] %v1081
        %1210 = vst [vmem:[%s202 + $0xe0] sm:$0xf] %v1082
        %1211 = vst [vmem:[%s202 + $0xe4] sm:$0xf] %v1083
        %1212 = vst [vmem:[%s202 + $0xe8] sm:$0xf] %v1084
        %1213 = vst [vmem:[%s202 + $0xec] sm:$0xf] %v1085
        %1214 = vst [vmem:[%s202 + $0xf0] sm:$0xf] %v1086
        %1215 = vst [vmem:[%s202 + $0xf4] sm:$0xf] %v1087
        %1216 = vst [vmem:[%s202 + $0xf8] sm:$0xf] %v1088
        %1217 = vst [vmem:[%s202 + $0xfc] sm:$0xf] %v1089
        %s1218 = sand.u32 %s117, 1
        %s1219 = scalar_lea.sflag [#allocation3], %s1218
        %s1220 = sand.u32 %s117, 1
        %s1221 = smul.addr %s1220, 256
        %s1222 = scalar_lea.vmem [#allocation2], %s1221
        // Predicated region
        $region33: #{_conv_impl.1} parent=31 // pred_check
          %p1223 = pneg %p127
        $region34: #{_conv_impl.1} parent=31 // pred_check_branch
          %1225 = sbr.rel (%p1223) target = $region36
        $region35: #{_conv_impl.1} parent=31 // pred_region
          %s1226 = smul.u32 64, %s21
          %s1228 = ssub.s32 4096, 4096
          %1229 = vsyncadd %s1219, %s1228
          %s1230 = sadd.s32 %s22, %s1226
          %s1231 = smul.addr %s1230, 64
          %s1232 = scalar_lea.hbm %s3, %s1231
          %s1233 = sshll.u32 %s1222, 4
          %s1234 = int_to_ptr.vmem [resolvable:$true] %s1233
          %1239 = dma.vmem_to_hbm [thread:$0]  %s1234, 4096, %s1232, %s1219, 64, 64, 4
        $region36: #{_conv_impl.1} parent=31 // pred_fallthru
          _
      $region32: #{_conv_impl.1} parent=5 // pred_fallthru
        _
      %p1240 = scmp.le.s32.totalorder 2, %s12
      // Predicated region
      $region37: #{_conv_impl.1} parent=5 // pred_check
        %p1241 = pneg %p1240
      $region38: #{_conv_impl.1} parent=5 // pred_check_branch
        %1243 = sbr.rel (%p1241) target = $region40
      $region39: #{_conv_impl.1} parent=5 // pred_region
        %s1244 = ssub.s32 %s12, 2
        // Predicated region
        $region41: #{_conv_impl.1} parent=39 // pred_check
          %p1245 = pneg %p133
        $region42: #{_conv_impl.1} parent=39 // pred_check_branch
          %1247 = sbr.rel (%p1245) target = $region44
        $region43: #{_conv_impl.1} parent=39 // pred_region
          %s1248 = sand.u32 %s118, 1
          %s1249 = scalar_lea.sflag [#allocation3], %s1248
          %s1250 = sand.u32 %s118, 1
          %s1251 = smul.addr %s1250, 256
          %s1252 = scalar_lea.vmem [#allocation2], %s1251
          %1253 = dma.done %s1249, 4096
        $region44: #{_conv_impl.1} parent=39 // pred_fallthru
          _
      $region40: #{_conv_impl.1} parent=5 // pred_fallthru
        _
    $region6: #{_conv_impl.1} parent=1 // loop_footer
      %s16 = sadd.s32 1, %s12
    $region7: #{_conv_impl.1} parent=1 // loop_footer_branch
      %11 = sbr.rel target = $region3
    $region8: #{_conv_impl.1} parent=1 // loop_exit
      _
    %1254 = vsyncpa [#allocation3], 1
    %s1255 = scalar_lea.sflag [#allocation3], 1
    %1256 = vsyncpa %s1255, 1

</llo_original>
